<compile_context>
chip_gen: v5e
topology: v5e:2x2
jax: 0.10.0
libtpu: 0.0.40
codegen_flags: <defaults>
</compile_context>

<pallas_src>
import functools
import math

import jax
import jax.numpy as jnp
from jax.experimental import pallas as pl
from jax.experimental.pallas import tpu as pltpu


def _pow_kernel(x_ref, o_ref, *, order: int):
    """Elementwise x ** order on one VMEM tile (static integer order, |order| >= 2 or -1)."""
    x = x_ref[...]
    p = abs(order)
    # Exponentiation by squaring: ~log2(|order|) multiplies, short live ranges.
    y = None
    base = x
    e = p
    while e > 0:
        if e & 1:
            y = base if y is None else y * base
        e >>= 1
        if e:
            base = base * base
    if order < 0:
        # Float-only path (wrapper rejects negative order for integer dtypes).
        y = pl.reciprocal(y, approx=False)
    o_ref[...] = y


def _round_up(a: int, b: int) -> int:
    return ((a + b - 1) // b) * b


def _device_info():
    """(tensorcores a single Pallas grid is sharded across, device_kind string)."""
    try:
        kind = (getattr(jax.devices()[0], "device_kind", "") or "").lower()
    except Exception:  # pragma: no cover - defensive (e.g. odd backends)
        kind = ""
    # Megacore chips (v4 / v5p) and v7x expose 2 TensorCores per device; the
    # "parallel" grid axis is only sharded there. v5e / v6e are single-TC.
    two_tc = ("v4" in kind) or ("v5p" in kind) or ("v7" in kind)
    return (2 if two_tc else 1), kind


def polynomial_nn(x: jax.Array, order: int = 2) -> jax.Array:
    """Elementwise x ** order (PolynomialNN.forward) via a Pallas TPU kernel."""
    order = int(order)
    orig_shape = x.shape
    dtype = x.dtype

    # Trivial orders: never stream the tensor through a kernel.
    if order == 0:
        return jnp.ones(orig_shape, dtype=dtype)
    if order == 1:
        return x
    if order < 0 and jnp.issubdtype(dtype, jnp.integer):
        # torch.pow raises for negative integer exponents on integer tensors.
        raise ValueError("negative `order` requires a floating-point input")

    n = x.size
    if n == 0:
        return x

    itemsize = jnp.dtype(dtype).itemsize
    # Sublane packing: 8 rows per 32-bit tile, 16 for 16-bit, 32 for 8-bit.
    packing = 8 * max(1, 4 // max(1, itemsize))

    # Pick the widest lane dim that divides the element count exactly.
    lanes = None
    for cand in (1024, 512, 256, 128):
        if n % cand == 0:
            lanes = cand
            break
    if lanes is None:
        # Ragged element count: pad + slice would add two extra full HBM
        # passes to a purely memory-bound op. Let XLA do it in one fused pass.
        return jnp.power(x, order).astype(dtype)

    rows = n // lanes
    num_tc, kind = _device_info()

    # Generation-aware block sizing: big blocks amortize the ~0.35us/step
    # overhead (critical at v7x's ~3.2 TB/s), smaller is fine on v5e.
    if ("v5 lite" in kind) or ("v5e" in kind):
        target_block_bytes = 4 << 20
    else:
        target_block_bytes = 8 << 20
    target_rows = max(
        packing, (target_block_bytes // (lanes * itemsize)) // packing * packing
    )

    if rows > target_rows:
        tile_rows = target_rows
    elif num_tc >= 2 and rows >= 2 * packing:
        # Only split small inputs on 2-TC chips; on 1-TC chips it is pure overhead.
        tile_rows = _round_up(pl.cdiv(rows, 2), packing)
    else:
        tile_rows = rows  # full-extent block (valid even below sublane packing)

    steps = pl.cdiv(rows, tile_rows)
    if num_tc >= 2 and steps > 1 and steps % 2 == 1:
        # Even step count so neither TensorCore gets a straggler block.
        cand_rows = max(packing, _round_up(pl.cdiv(rows, steps + 1), packing))
        if pl.cdiv(rows, cand_rows) % 2 == 0:
            tile_rows = cand_rows
            steps = pl.cdiv(rows, tile_rows)

    x2d = x.reshape(rows, lanes)

    n_mults = max(1, math.ceil(math.log2(abs(order))))
    cost = pl.CostEstimate(
        flops=n * n_mults,
        transcendentals=n if order < 0 else 0,
        bytes_accessed=2 * n * itemsize,
    )

    out2d = pl.pallas_call(
        functools.partial(_pow_kernel, order=order),
        out_shape=jax.ShapeDtypeStruct((rows, lanes), dtype),
        grid=(steps,),
        in_specs=[pl.BlockSpec((tile_rows, lanes), lambda i: (i, 0))],
        out_specs=pl.BlockSpec((tile_rows, lanes), lambda i: (i, 0)),
        input_output_aliases={0: 0},
        compiler_params=pltpu.CompilerParams(
            dimension_semantics=("parallel",),
            vmem_limit_bytes=40 << 20,
        ),
        cost_estimate=cost,
    )(x2d)

    return out2d.reshape(orig_shape)


if __name__ == "__main__":
    key = jax.random.PRNGKey(0)
    k1, k2, k3 = jax.random.split(key, 3)

    # Small NCHW-style activation, module default order=2.
    x = jax.random.normal(k1, (2, 4, 16, 16), dtype=jnp.float32)
    y = polynomial_nn(x, order=2)
    jax.block_until_ready(y)
    assert y.shape == x.shape and y.dtype == x.dtype
    assert jnp.allclose(y, jnp.power(x, 2), atol=1e-6, rtol=1e-6)

    # Multi-row slab, higher order (exercises the 2-step path on 2-TC chips).
    x2 = jax.random.normal(k2, (4, 8, 32, 128), dtype=jnp.float32)
    y2 = polynomial_nn(x2, order=3)
    jax.block_until_ready(y2)
    assert jnp.allclose(y2, jnp.power(x2, 3), atol=1e-5, rtol=1e-5)

    # Negative order on floats: y = 1 / x**2 (kept away from zero).
    x3 = jax.random.normal(k3, (2, 8, 128), dtype=jnp.float32) + 3.0
    y3 = polynomial_nn(x3, order=-2)
    jax.block_until_ready(y3)
    assert jnp.allclose(y3, 1.0 / (x3 * x3), atol=1e-6, rtol=1e-5)

    # Non-128-divisible element count: fused XLA fallback (no pad + slice passes).
    x4 = jax.random.normal(key, (3, 5, 7), dtype=jnp.float32)
    y4 = polynomial_nn(x4, order=3)
    jax.block_until_ready(y4)
    assert jnp.allclose(y4, jnp.power(x4, 3), atol=1e-6, rtol=1e-5)

    print("KERNEL_OK")
</pallas_src>

<mosaic_0001>
module attributes {stable_mosaic.version = 11 : i64} {
  func.func @_pow_kernel(%arg0: i32, %arg1: memref<2x1024xf32, #tpu.memory_space<vmem>>, %arg2: memref<2x1024xf32, #tpu.memory_space<vmem>>) attributes {dimension_semantics = [#tpu.dimension_semantics<parallel>], iteration_bounds = array<i64: 1>, scalar_prefetch = 0 : i64, scratch_operands = 0 : i64, tpu.core_type = #tpu.core_type<tc>, window_params = [{transform_indices = @transform_0, window_bounds = array<i64: 2, 1024>}, {transform_indices = @transform_1, window_bounds = array<i64: 2, 1024>}]} {
    %c0 = arith.constant 0 : index
    %c0_0 = arith.constant 0 : index
    %0 = vector.load %arg1[%c0, %c0_0] : memref<2x1024xf32, #tpu.memory_space<vmem>>, vector<2x1024xf32>
    %1 = arith.mulf %0, %0 : vector<2x1024xf32>
    %c0_1 = arith.constant 0 : index
    %c0_2 = arith.constant 0 : index
    %2 = vector.load %arg2[%c0_1, %c0_2] : memref<2x1024xf32, #tpu.memory_space<vmem>>, vector<2x1024xf32>
    tpu.vector_store %arg2[%c0_1, %c0_2], %1 {strides = array<i32>} : memref<2x1024xf32, #tpu.memory_space<vmem>>, vector<2x1024xf32>,
    return
  }
  func.func @transform_0(%arg0: i32) -> (i32, i32) {
    %c0_i32 = arith.constant 0 : i32
    %c0_i32_0 = arith.constant 0 : i32
    return %arg0, %c0_i32 : i32, i32
  }
  func.func @transform_1(%arg0: i32) -> (i32, i32) {
    %c0_i32 = arith.constant 0 : i32
    %c0_i32_0 = arith.constant 0 : i32
    return %arg0, %c0_i32 : i32, i32
  }
}

</mosaic_0001>

<llo_original>
// kernel: tpu_custom_call.1
$region0: #{tpu_custom_call.1}
  #allocation0 [shape = 'u32[]', space=smem, size = 0x4, offset = 0x4, fixed_abs, tag = 'smem constant byte address 0x4 - core index']
  #allocation1 [shape = 'u32[72,128]{1,0:T(1,128)}', space=vmem, size = 0x9000, scoped, tag = 'internal scratch']
  %s0 = inlined_call_operand.hbm [shape: f32[2,1024], index: 0, kind: input, shape index: {}, may-alias: {0,1}]
  %s1 = inlined_call_operand.hbm [shape: f32[2,1024], index: 1, kind: output, shape index: {}, may-alias: {0,1}]
  %s2 = sld [smem:[#allocation0]]
  $region18: #{tpu_custom_call.1} parent=0
    _
  %s4 = ssub.s32 1, %s2
  %s5 = scalar_select 0, %s4, %s2
  $region1: #{tpu_custom_call.1} parent=0
    #allocation2 [shape = 'u8[8192]{0}', space=vmem, size = 0x2000, scoped, tag = 'input window, operand 0, single buffered']
    #allocation3 [shape = 's32[1]{0}', space=sflag, size = 0x4, scoped, tag = 'scoped memory for tpu_custom_call.1']
    #allocation4 [shape = 's32[1]{0}', space=sflag, size = 0x4, scoped, tag = 'scoped memory for tpu_custom_call.1']
    #allocation5 [shape = 'u8[8192]{0}', space=vmem, size = 0x2000, scoped, tag = 'output window, operand 0, single buffered']
    %6 = vsyncpa [#allocation3], 0
    %7 = vsyncpa [#allocation4], 0
    // Predicated region
    $region2: #{tpu_custom_call.1} parent=1 // pred_check
      _
    $region3: #{tpu_custom_call.1} parent=1 // pred_check_branch
      %9 = sbr.rel (0) target = $region5
    $region4: #{tpu_custom_call.1} parent=1 // pred_region
      %11 = vsyncadd [#allocation3], 0
      %s13 = sshll.u32 %s0, 4
      %s14 = int_to_ptr.hbm [resolvable:$true] %s13
      %s15 = sshll.u32 [#allocation2], 4
      %s16 = int_to_ptr.vmem [resolvable:$true] %s15
      %18 = dma.hbm_to_vmem [thread:$0]  %s14, 256, %s16, [#allocation3]
    $region5: #{tpu_custom_call.1} parent=1 // pred_fallthru
      _
    // Predicated region
    $region6: #{tpu_custom_call.1} parent=1 // pred_check
      _
    $region7: #{tpu_custom_call.1} parent=1 // pred_check_branch
      %20 = sbr.rel (0) target = $region9
    $region8: #{tpu_custom_call.1} parent=1 // pred_region
      %22 = dma.done [#allocation3], 256
    $region9: #{tpu_custom_call.1} parent=1 // pred_fallthru
      _
    %v23 = vld [vmem:[#allocation2] sm:$0xff]
    %v24 = vld [vmem:[#allocation2 + $0x8] sm:$0xff]
    %v25 = vmul.f32 %v23, %v23
    %v26 = vmul.f32 %v24, %v24
    %27 = vst [vmem:[#allocation5] sm:$0xff] %v25
    %28 = vst [vmem:[#allocation5 + $0x8] sm:$0xff] %v26
    // Predicated region
    $region10: #{tpu_custom_call.1} parent=1 // pred_check
      _
    $region11: #{tpu_custom_call.1} parent=1 // pred_check_branch
      %30 = sbr.rel (0) target = $region13
    $region12: #{tpu_custom_call.1} parent=1 // pred_region
      %32 = vsyncadd [#allocation4], 0
      %s34 = sshll.u32 [#allocation5], 4
      %s35 = int_to_ptr.vmem [resolvable:$true] %s34
      %s36 = sshll.u32 %s1, 4
      %s37 = int_to_ptr.hbm [resolvable:$true] %s36
      %39 = dma.vmem_to_hbm [thread:$0]  %s35, 256, %s37, [#allocation4]
    $region13: #{tpu_custom_call.1} parent=1 // pred_fallthru
      _
    // Predicated region
    $region14: #{tpu_custom_call.1} parent=1 // pred_check
      _
    $region15: #{tpu_custom_call.1} parent=1 // pred_check_branch
      %41 = sbr.rel (0) target = $region17
    $region16: #{tpu_custom_call.1} parent=1 // pred_region
      %43 = dma.done [#allocation4], 256
    $region17: #{tpu_custom_call.1} parent=1 // pred_fallthru
      _
    %44 = vsyncpa [#allocation3], 1
    %45 = vsyncpa [#allocation4], 1

</llo_original>
